<compile_context>
chip_gen: v7x
topology: tpu7x:2x2x1
jax: 0.10.0
libtpu: 0.0.40
codegen_flags: <defaults>
</compile_context>

<pallas_src>
import functools
import math

import jax
import jax.numpy as jnp
from jax.experimental import pallas as pl
from jax.experimental.pallas import tpu as pltpu


def _glu_kernel(x_ref, w_ref, b_ref, o_ref, *, out_dim, activation):
    # One fused bf16 MXU matmul, f32 accumulation: (tm, in) @ (in, 2*out).
    h = jnp.dot(x_ref[...], w_ref[...], preferred_element_type=jnp.float32)
    h = h + b_ref[...]                         # (tm, 2*out_dim) f32
    w1 = h[:, :out_dim]                        # value half (lane-aligned slice)
    w2 = h[:, out_dim:]                        # gate half
    o_ref[...] = (w1 * activation(w2)).astype(o_ref.dtype)


def prepare_glu_params(weight, bias, compute_dtype=jnp.bfloat16):
    """One-time parameter prep (do this at module init, NOT per forward call).

    weight: (2*out_dim, in_dim)  -- PyTorch nn.Linear layout
    bias:   (2*out_dim,)
    Returns:
      w_t: (in_dim, 2*out_dim) in compute_dtype; cols [:out_dim] = value half,
           cols [out_dim:] = gate half (matches the torch .split semantics).
      b:   (1, 2*out_dim) float32.
    """
    two_out, in_dim = weight.shape
    w_t = jnp.asarray(weight).T.astype(compute_dtype)
    b = jnp.asarray(bias).reshape(1, two_out).astype(jnp.float32)
    return w_t, b


def _round_up(x, m):
    return ((x + m - 1) // m) * m


def glu_forward(x, w_t, b, *, activation=jax.nn.silu, block_rows=512):
    """GLU forward with pre-prepared params (see prepare_glu_params).

    x:   (..., in_dim)
    w_t: (in_dim, 2*out_dim)   pre-transposed, compute-dtype (bf16) weight
    b:   (1, 2*out_dim)        float32 bias
    returns (..., out_dim) in x.dtype
    """
    assert block_rows % 16 == 0, "bf16 sublane packing needs multiples of 16"
    in_dim, two_out = w_t.shape
    out_dim = two_out // 2
    lead = x.shape[:-1]
    n_rows = math.prod(lead) if lead else 1
    out_dtype = x.dtype
    cbytes = jnp.dtype(w_t.dtype).itemsize
    obytes = jnp.dtype(out_dtype).itemsize

    # Flatten all leading dims into one row axis; cast to the compute dtype.
    x2 = x.reshape(n_rows, in_dim).astype(w_t.dtype)

    # Row tile: no padding, Pallas masks the partial last block.
    # Note(v7x): if n_rows is small, a single-block grid leaves one TC idle;
    # shrink block_rows for tiny batches on v7x if that matters.
    tm = min(block_rows, _round_up(n_rows, 16))
    grid = (pl.cdiv(n_rows, tm),)

    # Explicit VMEM budget: x tile + weight + bias + output tile (each with its
    # 2 pipeline buffers) + the f32 matmul result, plus headroom.
    vmem_bytes = (
        2 * tm * in_dim * cbytes          # x tile (double buffered)
        + 2 * in_dim * two_out * cbytes   # weight (constant index map)
        + 2 * 8 * two_out * 4             # bias, padded to 8 sublanes, f32
        + 2 * tm * out_dim * obytes       # output tile (double buffered)
        + tm * two_out * 4                # f32 intermediate h
    )
    vmem_bytes = min(int(vmem_bytes * 1.5) + (1 << 20), 64 << 20)

    out2 = pl.pallas_call(
        functools.partial(_glu_kernel, out_dim=out_dim, activation=activation),
        out_shape=jax.ShapeDtypeStruct((n_rows, out_dim), out_dtype),
        grid=grid,
        in_specs=[
            pl.BlockSpec((tm, in_dim), lambda i: (i, 0)),        # x rows
            pl.BlockSpec((in_dim, two_out), lambda i: (0, 0)),   # fused weight
            pl.BlockSpec((1, two_out), lambda i: (0, 0)),        # fused bias
        ],
        out_specs=pl.BlockSpec((tm, out_dim), lambda i: (i, 0)),
        compiler_params=pltpu.CompilerParams(
            dimension_semantics=("parallel",),
            vmem_limit_bytes=vmem_bytes),
    )(x2, w_t, b)

    return out2.reshape(*lead, out_dim)


def _reference(x, weight, bias):
    """Pure-JAX f32 reference reproducing the PyTorch forward exactly."""
    y = jnp.einsum('...d,ed->...e', x, weight) + bias
    out_dim = weight.shape[0] // 2
    w1 = y[..., :out_dim]
    w2 = y[..., out_dim:]
    return w1 * jax.nn.silu(w2)


if __name__ == "__main__":
    # Small config: batch=2, seq=8, in_dim=256, out_dim=128
    B, S, IN, OUT = 2, 8, 256, 128
    key = jax.random.PRNGKey(0)
    k_x, k_w, k_b = jax.random.split(key, 3)

    bound = 1.0 / math.sqrt(IN)
    weight = jax.random.uniform(k_w, (2 * OUT, IN), jnp.float32, -bound, bound)
    bias = jax.random.uniform(k_b, (2 * OUT,), jnp.float32, -bound, bound)
    x = jax.random.normal(k_x, (B, S, IN), jnp.float32)

    # Parameter prep happens once (init-time), not per forward call.
    w_t, b = prepare_glu_params(weight, bias)

    out = jax.block_until_ready(glu_forward(x, w_t, b))
    ref = jax.block_until_ready(_reference(x, weight, bias))

    assert out.shape == (B, S, OUT), out.shape
    max_err = float(jnp.max(jnp.abs(out - ref)))
    # bf16 compute with f32 accumulation: loosen tolerance vs the f32 reference.
    assert jnp.allclose(out, ref, rtol=2e-2, atol=2e-2), f"max abs err {max_err}"
    print("KERNEL_OK")
</pallas_src>

<mosaic_0001>
module attributes {stable_mosaic.version = 11 : i64} {
  func.func @_glu_kernel(%arg0: i32, %arg1: memref<16x256xbf16, #tpu.memory_space<vmem>>, %arg2: memref<256x256xbf16, #tpu.memory_space<vmem>>, %arg3: memref<1x256xf32, #tpu.memory_space<vmem>>, %arg4: memref<16x128xf32, #tpu.memory_space<vmem>>) attributes {dimension_semantics = [#tpu.dimension_semantics<parallel>], iteration_bounds = array<i64: 1>, scalar_prefetch = 0 : i64, scratch_operands = 0 : i64, tpu.core_type = #tpu.core_type<tc>, window_params = [{transform_indices = @transform_0, window_bounds = array<i64: 16, 256>}, {pipeline_mode = #tpu.pipeline_mode<synchronous>, transform_indices = @transform_1, window_bounds = array<i64: 256, 256>}, {pipeline_mode = #tpu.pipeline_mode<synchronous>, transform_indices = @transform_2, window_bounds = array<i64: 1, 256>}, {transform_indices = @transform_3, window_bounds = array<i64: 16, 128>}]} {
    %c0 = arith.constant 0 : index
    %c0_0 = arith.constant 0 : index
    %0 = vector.load %arg1[%c0, %c0_0] : memref<16x256xbf16, #tpu.memory_space<vmem>>, vector<16x256xbf16>
    %c0_1 = arith.constant 0 : index
    %c0_2 = arith.constant 0 : index
    %1 = vector.load %arg2[%c0_1, %c0_2] : memref<256x256xbf16, #tpu.memory_space<vmem>>, vector<256x256xbf16>
    %cst = arith.constant dense<0.000000e+00> : vector<16x256xf32>
    %2 = tpu.matmul %0, %1, %cst {dimension_numbers = #tpu.dot_dimension_numbers<[1], [0], [0], [1], [0, 0, 1, 1], [], []>} : vector<16x256xbf16>, vector<256x256xbf16>, vector<16x256xf32> -> vector<16x256xf32>
    %c0_3 = arith.constant 0 : index
    %c0_4 = arith.constant 0 : index
    %3 = vector.load %arg3[%c0_3, %c0_4] : memref<1x256xf32, #tpu.memory_space<vmem>>, vector<1x256xf32>
    %4 = vector.broadcast %3 : vector<1x256xf32> to vector<16x256xf32>
    %5 = arith.addf %2, %4 : vector<16x256xf32>
    %6 = vector.extract_strided_slice %5 {offsets = [0, 0], sizes = [16, 128], strides = [1, 1]} : vector<16x256xf32> to vector<16x128xf32>
    %7 = vector.extract_strided_slice %5 {offsets = [0, 128], sizes = [16, 128], strides = [1, 1]} : vector<16x256xf32> to vector<16x128xf32>
    %8 = arith.negf %7 : vector<16x128xf32>
    %9 = math.exp %8 : vector<16x128xf32>
    %cst_5 = arith.constant 1.000000e+00 : f32
    %10 = vector.broadcast %cst_5 : f32 to vector<16x128xf32>
    %11 = arith.addf %10, %9 : vector<16x128xf32>
    %12 = arith.divf %10, %11 : vector<16x128xf32>
    %13 = arith.mulf %7, %12 : vector<16x128xf32>
    %14 = arith.mulf %6, %13 : vector<16x128xf32>
    %c0_6 = arith.constant 0 : index
    %c0_7 = arith.constant 0 : index
    %15 = vector.load %arg4[%c0_6, %c0_7] : memref<16x128xf32, #tpu.memory_space<vmem>>, vector<16x128xf32>
    tpu.vector_store %arg4[%c0_6, %c0_7], %14 {strides = array<i32>} : memref<16x128xf32, #tpu.memory_space<vmem>>, vector<16x128xf32>,
    return
  }
  func.func @transform_0(%arg0: i32) -> (i32, i32) {
    %c0_i32 = arith.constant 0 : i32
    %c0_i32_0 = arith.constant 0 : i32
    return %arg0, %c0_i32 : i32, i32
  }
  func.func @transform_1(%arg0: i32) -> (i32, i32) {
    %c0_i32 = arith.constant 0 : i32
    %c0_i32_0 = arith.constant 0 : i32
    %c0_i32_1 = arith.constant 0 : i32
    return %c0_i32, %c0_i32_0 : i32, i32
  }
  func.func @transform_2(%arg0: i32) -> (i32, i32) {
    %c0_i32 = arith.constant 0 : i32
    %c0_i32_0 = arith.constant 0 : i32
    %c0_i32_1 = arith.constant 0 : i32
    return %c0_i32, %c0_i32_0 : i32, i32
  }
  func.func @transform_3(%arg0: i32) -> (i32, i32) {
    %c0_i32 = arith.constant 0 : i32
    %c0_i32_0 = arith.constant 0 : i32
    return %arg0, %c0_i32 : i32, i32
  }
}

</mosaic_0001>

<llo_original>
// kernel: tpu_custom_call.1
$region0: #{tpu_custom_call.1}
  #allocation0 [shape = 'u32[]', space=smem, size = 0x4, offset = 0x4, fixed_abs, tag = 'smem constant byte address 0x4 - core index']
  #allocation1 [shape = 'u32[144,128]{1,0:T(1,128)}', space=vmem, size = 0x12000, scoped, tag = 'internal scratch']
  %s0 = inlined_call_operand.hbm [shape: bf16[16,256], index: 0, kind: input, shape index: {}]
  %s1 = inlined_call_operand.hbm [shape: bf16[256,256], index: 1, kind: input, shape index: {}]
  %s2 = inlined_call_operand.vmem [shape: f32[1,256], index: 2, kind: input, shape index: {}]
  %s3 = inlined_call_operand.hbm [shape: f32[16,128], index: 3, kind: output, shape index: {}]
  %s4 = sld [smem:[#allocation0]]
  $region30: #{tpu_custom_call.1} parent=0
    _
  %s6 = ssub.s32 1, %s4
  %s7 = scalar_select 0, %s6, %s4
  $region1: #{tpu_custom_call.1} parent=0
    #allocation2 [shape = 'u8[8192]{0}', space=vmem, size = 0x2000, scoped, tag = 'input window, operand 0, single buffered']
    #allocation3 [shape = 's32[1]{0}', space=sflag, size = 0x4, scoped, tag = 'scoped memory for tpu_custom_call.1']
    #allocation4 [shape = 's32[1]{0}', space=sflag, size = 0x4, scoped, tag = 'scoped memory for tpu_custom_call.1']
    #allocation5 [shape = 'u8[131072]{0}', space=vmem, size = 0x20000, scoped, tag = 'input window, operand 1, single buffered']
    #allocation6 [shape = 's32[1]{0}', space=sflag, size = 0x4, scoped, tag = 'scoped memory for tpu_custom_call.1']
    #allocation7 [shape = 'u8[8192]{0}', space=vmem, size = 0x2000, scoped, tag = 'output window, operand 0, single buffered']
    %8 = vsyncpa [#allocation3], 0
    %9 = vsyncpa [#allocation6], 0
    %10 = vsyncpa [#allocation4], 0
    // Predicated region
    $region2: #{tpu_custom_call.1} parent=1 // pred_check
      _
    $region3: #{tpu_custom_call.1} parent=1 // pred_check_branch
      %12 = sbr.rel (0) target = $region5
    $region4: #{tpu_custom_call.1} parent=1 // pred_region
      %s14 = ssub.s32 256, 256
      %15 = vsyncadd [#allocation3], %s14
      %s16 = sshll.u32 [#allocation2], 4
      %s17 = int_to_ptr.vmem [resolvable:$true] %s16
      %22 = dma.hbm_to_vmem [thread:$0]  %s0, 256, %s17, [#allocation3], 128, 128, 8
    $region5: #{tpu_custom_call.1} parent=1 // pred_fallthru
      _
    // Predicated region
    $region6: #{tpu_custom_call.1} parent=1 // pred_check
      _
    $region7: #{tpu_custom_call.1} parent=1 // pred_check_branch
      %24 = sbr.rel (0) target = $region9
    $region8: #{tpu_custom_call.1} parent=1 // pred_region
      %s26 = ssub.s32 4096, 4096
      %27 = vsyncadd [#allocation6], %s26
      %s28 = sshll.u32 [#allocation5], 4
      %s29 = int_to_ptr.vmem [resolvable:$true] %s28
      %34 = dma.hbm_to_vmem [thread:$0]  %s1, 4096, %s29, [#allocation6], 128, 128, 8
    $region9: #{tpu_custom_call.1} parent=1 // pred_fallthru
      _
    // Predicated region
    $region10: #{tpu_custom_call.1} parent=1 // pred_check
      _
    $region11: #{tpu_custom_call.1} parent=1 // pred_check_branch
      %36 = sbr.rel (0) target = $region13
    $region12: #{tpu_custom_call.1} parent=1 // pred_region
      _
    $region13: #{tpu_custom_call.1} parent=1 // pred_fallthru
      _
    // Predicated region
    $region14: #{tpu_custom_call.1} parent=1 // pred_check
      _
    $region15: #{tpu_custom_call.1} parent=1 // pred_check_branch
      %38 = sbr.rel (0) target = $region17
    $region16: #{tpu_custom_call.1} parent=1 // pred_region
      %39 = dma.done [#allocation3], 256
    $region17: #{tpu_custom_call.1} parent=1 // pred_fallthru
      _
    // Predicated region
    $region18: #{tpu_custom_call.1} parent=1 // pred_check
      _
    $region19: #{tpu_custom_call.1} parent=1 // pred_check_branch
      %41 = sbr.rel (0) target = $region21
    $region20: #{tpu_custom_call.1} parent=1 // pred_region
      %42 = dma.done [#allocation6], 4096
    $region21: #{tpu_custom_call.1} parent=1 // pred_fallthru
      _
    %v43 = vld [vmem:[#allocation2] sm:$0xff]
    %v44 = vld [vmem:[#allocation2 + $0x8] sm:$0xff]
    %v45 = vld [vmem:[#allocation5] sm:$0xff]
    %v46 = vld [vmem:[#allocation5 + $0x8] sm:$0xff]
    %v47 = vld [vmem:[#allocation5 + $0x10] sm:$0xff]
    %v48 = vld [vmem:[#allocation5 + $0x18] sm:$0xff]
    %v49 = vld [vmem:[#allocation5 + $0x20] sm:$0xff]
    %v50 = vld [vmem:[#allocation5 + $0x28] sm:$0xff]
    %v51 = vld [vmem:[#allocation5 + $0x30] sm:$0xff]
    %v52 = vld [vmem:[#allocation5 + $0x38] sm:$0xff]
    %v53 = vld [vmem:[#allocation5 + $0x40] sm:$0xff]
    %v54 = vld [vmem:[#allocation5 + $0x48] sm:$0xff]
    %v55 = vld [vmem:[#allocation5 + $0x50] sm:$0xff]
    %v56 = vld [vmem:[#allocation5 + $0x58] sm:$0xff]
    %v57 = vld [vmem:[#allocation5 + $0x60] sm:$0xff]
    %v58 = vld [vmem:[#allocation5 + $0x68] sm:$0xff]
    %v59 = vld [vmem:[#allocation5 + $0x70] sm:$0xff]
    %v60 = vld [vmem:[#allocation5 + $0x78] sm:$0xff]
    %v61 = vld [vmem:[#allocation5 + $0x80] sm:$0xff]
    %v62 = vld [vmem:[#allocation5 + $0x88] sm:$0xff]
    %v63 = vld [vmem:[#allocation5 + $0x90] sm:$0xff]
    %v64 = vld [vmem:[#allocation5 + $0x98] sm:$0xff]
    %v65 = vld [vmem:[#allocation5 + $0xa0] sm:$0xff]
    %v66 = vld [vmem:[#allocation5 + $0xa8] sm:$0xff]
    %v67 = vld [vmem:[#allocation5 + $0xb0] sm:$0xff]
    %v68 = vld [vmem:[#allocation5 + $0xb8] sm:$0xff]
    %v69 = vld [vmem:[#allocation5 + $0xc0] sm:$0xff]
    %v70 = vld [vmem:[#allocation5 + $0xc8] sm:$0xff]
    %v71 = vld [vmem:[#allocation5 + $0xd0] sm:$0xff]
    %v72 = vld [vmem:[#allocation5 + $0xd8] sm:$0xff]
    %v73 = vld [vmem:[#allocation5 + $0xe0] sm:$0xff]
    %v74 = vld [vmem:[#allocation5 + $0xe8] sm:$0xff]
    %v75 = vld [vmem:[#allocation5 + $0xf0] sm:$0xff]
    %v76 = vld [vmem:[#allocation5 + $0xf8] sm:$0xff]
    %v77 = vld [vmem:[%s2] sm:$0x3]
    %v79 = vlaneseq
    %v80 = vshrl.u32 %v79, 7
    %v81 = vsub.s32 0, %v80
    %v82 = vrot.slane %v77, %v81
    %v83 = vlaneseq
    %v84 = vshrl.u32 %v83, 7
    %v85 = vsub.s32 1, %v84
    %v86 = vrot.slane %v77, %v85
    %v91 = vunpack.c.l.b16 %v43
    %v92 = vunpack.c.h.b16 %v43
    %v93 = vunpack.c.l.b16 %v44
    %v94 = vunpack.c.h.b16 %v44
    %v95 = vpack.c.b16 %v93, %v91
    %v96 = vpack.c.b16 %v94, %v92
    %v131 = vunpack.c.l.b16 %v45
    %v132 = vunpack.c.h.b16 %v45
    %v133 = vunpack.c.l.b16 %v46
    %v134 = vunpack.c.h.b16 %v46
    %v135 = vunpack.c.l.b16 %v47
    %v136 = vunpack.c.h.b16 %v47
    %v137 = vunpack.c.l.b16 %v48
    %v138 = vunpack.c.h.b16 %v48
    %v139 = vunpack.c.l.b16 %v49
    %v140 = vunpack.c.h.b16 %v49
    %v141 = vunpack.c.l.b16 %v50
    %v142 = vunpack.c.h.b16 %v50
    %v143 = vunpack.c.l.b16 %v51
    %v144 = vunpack.c.h.b16 %v51
    %v145 = vunpack.c.l.b16 %v52
    %v146 = vunpack.c.h.b16 %v52
    %v147 = vunpack.c.l.b16 %v53
    %v148 = vunpack.c.h.b16 %v53
    %v149 = vunpack.c.l.b16 %v54
    %v150 = vunpack.c.h.b16 %v54
    %v151 = vunpack.c.l.b16 %v55
    %v152 = vunpack.c.h.b16 %v55
    %v153 = vunpack.c.l.b16 %v56
    %v154 = vunpack.c.h.b16 %v56
    %v155 = vunpack.c.l.b16 %v57
    %v156 = vunpack.c.h.b16 %v57
    %v157 = vunpack.c.l.b16 %v58
    %v158 = vunpack.c.h.b16 %v58
    %v159 = vunpack.c.l.b16 %v59
    %v160 = vunpack.c.h.b16 %v59
    %v161 = vunpack.c.l.b16 %v60
    %v162 = vunpack.c.h.b16 %v60
    %v163 = vunpack.c.l.b16 %v61
    %v164 = vunpack.c.h.b16 %v61
    %v165 = vunpack.c.l.b16 %v62
    %v166 = vunpack.c.h.b16 %v62
    %v167 = vunpack.c.l.b16 %v63
    %v168 = vunpack.c.h.b16 %v63
    %v169 = vunpack.c.l.b16 %v64
    %v170 = vunpack.c.h.b16 %v64
    %v171 = vunpack.c.l.b16 %v65
    %v172 = vunpack.c.h.b16 %v65
    %v173 = vunpack.c.l.b16 %v66
    %v174 = vunpack.c.h.b16 %v66
    %v175 = vunpack.c.l.b16 %v67
    %v176 = vunpack.c.h.b16 %v67
    %v177 = vunpack.c.l.b16 %v68
    %v178 = vunpack.c.h.b16 %v68
    %v179 = vunpack.c.l.b16 %v69
    %v180 = vunpack.c.h.b16 %v69
    %v181 = vunpack.c.l.b16 %v70
    %v182 = vunpack.c.h.b16 %v70
    %v183 = vunpack.c.l.b16 %v71
    %v184 = vunpack.c.h.b16 %v71
    %v185 = vunpack.c.l.b16 %v72
    %v186 = vunpack.c.h.b16 %v72
    %v187 = vunpack.c.l.b16 %v73
    %v188 = vunpack.c.h.b16 %v73
    %v189 = vunpack.c.l.b16 %v74
    %v190 = vunpack.c.h.b16 %v74
    %v191 = vunpack.c.l.b16 %v75
    %v192 = vunpack.c.h.b16 %v75
    %v193 = vunpack.c.l.b16 %v76
    %v194 = vunpack.c.h.b16 %v76
    %v195 = vpack.c.b16 %v133, %v131
    %v196 = vpack.c.b16 %v134, %v132
    %v197 = vpack.c.b16 %v137, %v135
    %v198 = vpack.c.b16 %v138, %v136
    %v199 = vpack.c.b16 %v141, %v139
    %v200 = vpack.c.b16 %v142, %v140
    %v201 = vpack.c.b16 %v145, %v143
    %v202 = vpack.c.b16 %v146, %v144
    %v203 = vpack.c.b16 %v149, %v147
    %v204 = vpack.c.b16 %v150, %v148
    %v205 = vpack.c.b16 %v153, %v151
    %v206 = vpack.c.b16 %v154, %v152
    %v207 = vpack.c.b16 %v157, %v155
    %v208 = vpack.c.b16 %v158, %v156
    %v209 = vpack.c.b16 %v161, %v159
    %v210 = vpack.c.b16 %v162, %v160
    %v211 = vpack.c.b16 %v165, %v163
    %v212 = vpack.c.b16 %v166, %v164
    %v213 = vpack.c.b16 %v169, %v167
    %v214 = vpack.c.b16 %v170, %v168
    %v215 = vpack.c.b16 %v173, %v171
    %v216 = vpack.c.b16 %v174, %v172
    %v217 = vpack.c.b16 %v177, %v175
    %v218 = vpack.c.b16 %v178, %v176
    %v219 = vpack.c.b16 %v181, %v179
    %v220 = vpack.c.b16 %v182, %v180
    %v221 = vpack.c.b16 %v185, %v183
    %v222 = vpack.c.b16 %v186, %v184
    %v223 = vpack.c.b16 %v189, %v187
    %v224 = vpack.c.b16 %v190, %v188
    %v225 = vpack.c.b16 %v193, %v191
    %v226 = vpack.c.b16 %v194, %v192
    %259 = vmatprep.subr.bf16.mxu0 %v196
    %260 = vmatpush1.bf16.msra.mxu0 %v195
    %261 = vmatprep.subr.bf16.mxu0 %v198
    %262 = vmatpush1.bf16.msra.mxu0 %v197
    %263 = vmatprep.subr.bf16.mxu0 %v200
    %264 = vmatpush1.bf16.msra.mxu0 %v199
    %265 = vmatprep.subr.bf16.mxu0 %v202
    %266 = vmatpush1.bf16.msra.mxu0 %v201
    %267 = vmatprep.subr.bf16.mxu0 %v204
    %268 = vmatpush1.bf16.msra.mxu0 %v203
    %269 = vmatprep.subr.bf16.mxu0 %v206
    %270 = vmatpush1.bf16.msra.mxu0 %v205
    %271 = vmatprep.subr.bf16.mxu0 %v208
    %272 = vmatpush1.bf16.msra.mxu0 %v207
    %273 = vmatprep.subr.bf16.mxu0 %v210
    %274 = vmatpush1.bf16.msra.mxu0 %v209
    %275 = vmatprep.subr.bf16.mxu0 %v212
    %276 = vmatpush1.bf16.msra.mxu0 %v211
    %277 = vmatprep.subr.bf16.mxu0 %v214
    %278 = vmatpush1.bf16.msra.mxu0 %v213
    %279 = vmatprep.subr.bf16.mxu0 %v216
    %280 = vmatpush1.bf16.msra.mxu0 %v215
    %281 = vmatprep.subr.bf16.mxu0 %v218
    %282 = vmatpush1.bf16.msra.mxu0 %v217
    %283 = vmatprep.subr.bf16.mxu0 %v220
    %284 = vmatpush1.bf16.msra.mxu0 %v219
    %285 = vmatprep.subr.bf16.mxu0 %v222
    %286 = vmatpush1.bf16.msra.mxu0 %v221
    %287 = vmatprep.subr.bf16.mxu0 %v224
    %288 = vmatpush1.bf16.msra.mxu0 %v223
    %289 = vmatprep.subr.bf16.mxu0 %v226
    %290 = vmatpush1.bf16.msra.mxu0 %v225
    %291 = vmatprep.mubr.bf16.mxu0 %v96
    %292 = vmatmul.mubr.bf16.gmra.mrb[0].mxu0 %v95
    %v293 = vpop.f32.mrb[0].mxu0
    %v294 = vadd.f32 %v82, %v293
    %v295 = vpop.f32.mrb[0].mxu0
    %v296 = vadd.f32 %v86, %v295
    %v297 = vpop.f32.mrb[0].mxu0
    %v298 = vadd.f32 %v82, %v297
    %v299 = vpop.f32.mrb[0].mxu0
    %v300 = vadd.f32 %v86, %v299
    %301 = vdwg.mxu0
    %v302 = vxor.u32 %v296, 2147483648
    %v303 = vxor.u32 %v300, 2147483648
    %v304 = vmul.f32 %v302, 1.442695
    %v305 = vpow.pop %v304
    %v306 = vmul.f32 %v303, 1.442695
    %v307 = vpow.pop %v306
    %v308 = vadd.f32 %v305, 1.0
    %v309 = vadd.f32 %v307, 1.0
    %v310 = vrcp.pop %v308
    %v311 = vmul.f32 1.0, %v310
    %v312 = vrcp.pop %v309
    %v313 = vmul.f32 1.0, %v312
    %v314 = vmul.f32 %v296, %v311
    %v315 = vmul.f32 %v300, %v313
    %v316 = vmul.f32 %v294, %v314
    %v317 = vmul.f32 %v298, %v315
    %318 = vst [vmem:[#allocation7] sm:$0xff] %v316
    %319 = vst [vmem:[#allocation7 + $0x8] sm:$0xff] %v317
    // Predicated region
    $region22: #{tpu_custom_call.1} parent=1 // pred_check
      _
    $region23: #{tpu_custom_call.1} parent=1 // pred_check_branch
      %321 = sbr.rel (0) target = $region25
    $region24: #{tpu_custom_call.1} parent=1 // pred_region
      %s323 = ssub.s32 256, 256
      %324 = vsyncadd [#allocation4], %s323
      %s325 = sshll.u32 [#allocation7], 4
      %s326 = int_to_ptr.vmem [resolvable:$true] %s325
      %331 = dma.vmem_to_hbm [thread:$0]  %s326, 256, %s3, [#allocation4], 128, 128, 8
    $region25: #{tpu_custom_call.1} parent=1 // pred_fallthru
      _
    // Predicated region
    $region26: #{tpu_custom_call.1} parent=1 // pred_check
      _
    $region27: #{tpu_custom_call.1} parent=1 // pred_check_branch
      %333 = sbr.rel (0) target = $region29
    $region28: #{tpu_custom_call.1} parent=1 // pred_region
      %334 = dma.done [#allocation4], 256
    $region29: #{tpu_custom_call.1} parent=1 // pred_fallthru
      _
    %335 = vsyncpa [#allocation3], 1
    %336 = vsyncpa [#allocation6], 1
    %337 = vsyncpa [#allocation4], 1

</llo_original>
